<compile_context>
chip_gen: v7x
topology: tpu7x:2x2x1
jax: 0.10.0
libtpu: 0.0.40
codegen_flags: <defaults>
</compile_context>

<pallas_src>
import jax
import jax.numpy as jnp
from jax.experimental import pallas as pl
from jax.experimental.pallas import tpu as pltpu

_LANE = 128


def _round_up(x, m):
    return ((x + m - 1) // m) * m


def _choose_m_tile(m, cap=512):
    """Tile for the flattened M = N*Hout*Wout axis.

    Multiple of 16 (bf16 sublane packing), as large as possible up to `cap`
    (~85% of HBM roofline at 512 per measured data), but halved until there are
    >= 2 grid steps so both v7x TensorCores get work and the auto-pipeliner has
    something to overlap.
    """
    if m <= 16:
        return 16
    t = min(cap, _round_up(m, 16))
    while t > 16 and -(-m // t) < 2:
        t //= 2
    return max(16, (t // 16) * 16)


def _make_kernel(apply_relu: bool):
    # Scale/BN/shortcut are pre-folded into the weight matrix and bias vector,
    # so the epilogue is a single VPU add (+relu) hidden under the matmul.
    def kernel(x_ref, w_ref, b_ref, o_ref):
        acc = jnp.dot(x_ref[...], w_ref[...], preferred_element_type=jnp.float32)
        y = acc + b_ref[...]
        if apply_relu:
            y = jnp.maximum(y, 0.0)
        o_ref[...] = y.astype(o_ref.dtype)
    return kernel


def conv_bn_pallas(x_nhwc, w_oihw, scale, bias, *, stride, pad, apply_relu,
                   skip=None, out_dtype=jnp.float32, matmul_dtype=jnp.bfloat16):
    """Conv2d(KxK, pad, stride) + folded BN affine (+fused shortcut) (+relu).

    x_nhwc : (N, H, W, Cin)  (f32 or bf16)
    w_oihw : (Cout, Cin, K, K) float32 (PyTorch weight layout)
    scale, bias : (Cout,) folded BN / conv-bias affine (scale folded into W)
    skip   : optional (xs, w_skip, b_skip):
             xs (N, Hout, Wout, Cs), w_skip (Cs, Cout), b_skip (Cout,)
             -- fused into the same matmul (1x1 projection or identity).
    returns: (N, Hout, Wout, Cout) in out_dtype
    """
    N, H, W, Cin = x_nhwc.shape
    Cout, _, K, _ = w_oihw.shape
    Hout = (H + 2 * pad - K) // stride + 1
    Wout = (W + 2 * pad - K) // stride + 1
    M = N * Hout * Wout
    KKC = K * K * Cin
    Cout_p = _round_up(Cout, _LANE)

    # ---- glue: pad + im2col (data rearrangement only); K dim left unpadded --
    xp = jnp.pad(x_nhwc, ((0, 0), (pad, pad), (pad, pad), (0, 0)))
    cols = []
    for kh in range(K):
        for kw in range(K):
            cols.append(xp[:, kh:kh + (Hout - 1) * stride + 1:stride,
                              kw:kw + (Wout - 1) * stride + 1:stride, :])
    patches = jnp.concatenate(cols, axis=-1).reshape(M, KKC).astype(matmul_dtype)

    # Fold BN scale into the conv weights (Cout,Cin,K,K)->(KKC,Cout)*scale.
    wmat = jnp.transpose(w_oihw, (2, 3, 1, 0)).reshape(KKC, Cout).astype(jnp.float32)
    wmat = wmat * scale.astype(jnp.float32)[None, :]
    bias_total = bias.astype(jnp.float32)

    # Fuse the shortcut into the same matmul: extra K columns + stacked weight.
    if skip is not None:
        xs, w_skip, b_skip = skip
        Cs = xs.shape[-1]
        xs2 = xs.reshape(M, Cs).astype(matmul_dtype)
        patches = jnp.concatenate([patches, xs2], axis=-1)
        wmat = jnp.concatenate([wmat, w_skip.astype(jnp.float32)], axis=0)
        bias_total = bias_total + b_skip.astype(jnp.float32)

    Ktot = patches.shape[-1]
    wmat = jnp.pad(wmat, ((0, 0), (0, Cout_p - Cout))).astype(matmul_dtype)
    bias_p = jnp.pad(bias_total, (0, Cout_p - Cout)).reshape(1, Cout_p)

    # ---- single flattened M axis, padded to a whole number of tiles --------
    tm = _choose_m_tile(M)
    M_pad = _round_up(M, tm)
    if M_pad != M:
        patches = jnp.pad(patches, ((0, M_pad - M), (0, 0)))
    grid = (M_pad // tm,)

    in_specs = [
        pl.BlockSpec((tm, Ktot), lambda i: (i, 0)),        # activations (tiled M)
        pl.BlockSpec((Ktot, Cout_p), lambda i: (0, 0)),    # weights (resident)
        pl.BlockSpec((1, Cout_p), lambda i: (0, 0)),       # bias (resident)
    ]
    out_specs = pl.BlockSpec((tm, Cout_p), lambda i: (i, 0))

    # ---- cost estimate + generation-aware VMEM bound ------------------------
    itm = jnp.dtype(matmul_dtype).itemsize
    ito = jnp.dtype(out_dtype).itemsize
    flops = 2 * M_pad * Ktot * Cout_p
    bytes_accessed = (M_pad * Ktot * itm + Ktot * Cout_p * itm
                      + Cout_p * 4 + M_pad * Cout_p * ito)
    per_step = (2 * tm * Ktot * itm          # activation tile, double-buffered
                + 2 * tm * Cout_p * ito      # output tile, double-buffered
                + 2 * Ktot * Cout_p * itm    # resident weights (2 bufs worst case)
                + 2 * Cout_p * 4)            # bias
    try:
        info = pltpu.get_tpu_info()
        vmem_cap = int(getattr(info, "vmem_capacity_bytes", 64 * 1024 * 1024))
    except Exception:
        vmem_cap = 64 * 1024 * 1024          # conservative (v7x physical VMEM)
    vmem_limit = int(min(int(0.75 * vmem_cap),
                         max(16 * 1024 * 1024, 4 * per_step)))

    out = pl.pallas_call(
        _make_kernel(apply_relu),
        out_shape=jax.ShapeDtypeStruct((M_pad, Cout_p), out_dtype),
        grid=grid,
        in_specs=in_specs,
        out_specs=out_specs,
        compiler_params=pltpu.CompilerParams(
            dimension_semantics=("parallel",),
            vmem_limit_bytes=vmem_limit),
        cost_estimate=pl.CostEstimate(flops=int(flops), transcendentals=0,
                                      bytes_accessed=int(bytes_accessed)),
    )(patches, wmat, bias_p)

    return out[:M, :Cout].reshape(N, Hout, Wout, Cout)


# ----------------------------------------------------------------------------
# Residual block forward (wrapper; accepts PyTorch NCHW)
# ----------------------------------------------------------------------------
def residual_forward(x_nchw, params, *, use_1x1conv, strides,
                     matmul_dtype=jnp.bfloat16):
    eps = 1e-5
    x = jnp.transpose(x_nchw, (0, 2, 3, 1)).astype(jnp.float32)  # NHWC
    N, H, W, Cin = x.shape
    Cn = params["conv1_w"].shape[0]
    is_bf16 = jnp.dtype(matmul_dtype) == jnp.dtype(jnp.bfloat16)
    inter_dtype = jnp.bfloat16 if is_bf16 else jnp.float32

    # conv1 + bn1 + relu  (conv bias + BN folded; bf16 intermediate on fast path)
    s1 = params["bn1_gamma"] / jnp.sqrt(params["bn1_var"] + eps)
    b1 = (params["conv1_b"] - params["bn1_mean"]) * s1 + params["bn1_beta"]
    y = conv_bn_pallas(x, params["conv1_w"], s1, b1,
                       stride=strides, pad=1, apply_relu=True,
                       out_dtype=inter_dtype, matmul_dtype=matmul_dtype)
    _, Ho, Wo, _ = y.shape

    # conv2 + bn2 + shortcut + relu, all in one fused matmul kernel.
    s2 = params["bn2_gamma"] / jnp.sqrt(params["bn2_var"] + eps)
    b2 = (params["conv2_b"] - params["bn2_mean"]) * s2 + params["bn2_beta"]

    if use_1x1conv:
        # 1x1 / stride=s / pad=0 conv's im2col is just the strided input.
        xs = x[:, ::strides, ::strides, :]                       # (N, Ho, Wo, Cin)
        w_skip = params["conv3_w"].reshape(Cn, Cin).T            # (Cin, Cn)
        skip = (xs, w_skip, params["conv3_b"])
    else:
        assert Cin == Cn and strides == 1, \
            "identity shortcut requires Cin == Cn and stride == 1"
        # Identity shortcut expressed as extra K columns with an identity weight
        # -> no padded f32 skip tensor in HBM, no second DMA stream.
        skip = (x, jnp.eye(Cin, dtype=jnp.float32),
                jnp.zeros((Cn,), jnp.float32))

    out = conv_bn_pallas(y, params["conv2_w"], s2, b2,
                         stride=1, pad=1, apply_relu=True, skip=skip,
                         out_dtype=jnp.float32, matmul_dtype=matmul_dtype)
    return jnp.transpose(out, (0, 3, 1, 2))  # back to NCHW


# ----------------------------------------------------------------------------
# Plain-JAX reference (mirrors the PyTorch module in eval mode)
# ----------------------------------------------------------------------------
def residual_reference(x, params, *, use_1x1conv, strides):
    eps = 1e-5

    def conv(x, w, b, stride, pad):
        y = jax.lax.conv_general_dilated(
            x, w, (stride, stride), [(pad, pad), (pad, pad)],
            dimension_numbers=("NCHW", "OIHW", "NCHW"))
        return y + b[None, :, None, None]

    def bn(x, g, be, m, v):
        return (g[None, :, None, None] * (x - m[None, :, None, None])
                / jnp.sqrt(v[None, :, None, None] + eps)
                + be[None, :, None, None])

    Y = jax.nn.relu(bn(conv(x, params["conv1_w"], params["conv1_b"], strides, 1),
                       params["bn1_gamma"], params["bn1_beta"],
                       params["bn1_mean"], params["bn1_var"]))
    Y = bn(conv(Y, params["conv2_w"], params["conv2_b"], 1, 1),
           params["bn2_gamma"], params["bn2_beta"],
           params["bn2_mean"], params["bn2_var"])
    if use_1x1conv:
        X = conv(x, params["conv3_w"], params["conv3_b"], strides, 0)
    else:
        X = x
    return jax.nn.relu(Y + X)


# ----------------------------------------------------------------------------
# Deterministic parameter construction
# ----------------------------------------------------------------------------
def make_params(key, input_channels, num_channels):
    ks = jax.random.split(key, 14)
    n = lambda k, s: (0.1 * jax.random.normal(k, s)).astype(jnp.float32)
    return {
        "conv1_w": n(ks[0], (num_channels, input_channels, 3, 3)),
        "conv1_b": n(ks[1], (num_channels,)),
        "conv2_w": n(ks[2], (num_channels, num_channels, 3, 3)),
        "conv2_b": n(ks[3], (num_channels,)),
        "conv3_w": n(ks[4], (num_channels, input_channels, 1, 1)),
        "conv3_b": n(ks[5], (num_channels,)),
        "bn1_gamma": (1.0 + 0.1 * jax.random.normal(ks[6], (num_channels,))).astype(jnp.float32),
        "bn1_beta": n(ks[7], (num_channels,)),
        "bn1_mean": n(ks[8], (num_channels,)),
        "bn1_var": (0.5 + jax.random.uniform(ks[9], (num_channels,))).astype(jnp.float32),
        "bn2_gamma": (1.0 + 0.1 * jax.random.normal(ks[10], (num_channels,))).astype(jnp.float32),
        "bn2_beta": n(ks[11], (num_channels,)),
        "bn2_mean": n(ks[12], (num_channels,)),
        "bn2_var": (0.5 + jax.random.uniform(ks[13], (num_channels,))).astype(jnp.float32),
    }


if __name__ == "__main__":
    key = jax.random.PRNGKey(0)
    k_x, k_p1, k_p2 = jax.random.split(key, 3)

    # Case 1: projection shortcut, downsampling (use_1x1conv=True, strides=2)
    N, Cin, Cn, H, W = 2, 4, 8, 16, 16
    x = jax.random.normal(k_x, (N, Cin, H, W), dtype=jnp.float32)
    params1 = make_params(k_p1, Cin, Cn)
    ref1 = residual_reference(x, params1, use_1x1conv=True, strides=2)

    # (a) strict numerics check with f32 matmul inputs
    out1_f32 = residual_forward(x, params1, use_1x1conv=True, strides=2,
                                matmul_dtype=jnp.float32)
    out1_f32 = jax.block_until_ready(out1_f32)
    assert out1_f32.shape == (N, Cn, H // 2, W // 2)
    assert jnp.allclose(out1_f32, ref1, atol=2e-4, rtol=2e-4), "mismatch (f32, 1x1conv)"

    # (b) performance path: bf16 MXU inputs, f32 accumulation/epilogue
    out1 = residual_forward(x, params1, use_1x1conv=True, strides=2)
    out1 = jax.block_until_ready(out1)
    assert out1.shape == (N, Cn, H // 2, W // 2)
    assert jnp.allclose(out1, ref1, atol=5e-2, rtol=5e-2), "mismatch (bf16, 1x1conv)"

    # Case 2: identity shortcut (use_1x1conv=False, strides=1)
    params2 = make_params(k_p2, Cin, Cin)
    ref2 = residual_reference(x, params2, use_1x1conv=False, strides=1)

    out2_f32 = residual_forward(x, params2, use_1x1conv=False, strides=1,
                                matmul_dtype=jnp.float32)
    out2_f32 = jax.block_until_ready(out2_f32)
    assert out2_f32.shape == (N, Cin, H, W)
    assert jnp.allclose(out2_f32, ref2, atol=2e-4, rtol=2e-4), "mismatch (f32, identity)"

    out2 = residual_forward(x, params2, use_1x1conv=False, strides=1)
    out2 = jax.block_until_ready(out2)
    assert out2.shape == (N, Cin, H, W)
    assert jnp.allclose(out2, ref2, atol=5e-2, rtol=5e-2), "mismatch (bf16, identity)"

    print("KERNEL_OK")
</pallas_src>

<mosaic_0001>
module attributes {stable_mosaic.version = 11 : i64} {
  func.func @kernel(%arg0: i32, %arg1: memref<64x36xf32, #tpu.memory_space<vmem>>, %arg2: memref<36x128xf32, #tpu.memory_space<vmem>>, %arg3: memref<1x128xf32, #tpu.memory_space<vmem>>, %arg4: memref<64x128xf32, #tpu.memory_space<vmem>>) attributes {dimension_semantics = [#tpu.dimension_semantics<parallel>], iteration_bounds = array<i64: 2>, scalar_prefetch = 0 : i64, scratch_operands = 0 : i64, tpu.core_type = #tpu.core_type<tc>, window_params = [{transform_indices = @transform_0, window_bounds = array<i64: 64, 36>}, {pipeline_mode = #tpu.pipeline_mode<synchronous>, transform_indices = @transform_1, window_bounds = array<i64: 36, 128>}, {pipeline_mode = #tpu.pipeline_mode<synchronous>, transform_indices = @transform_2, window_bounds = array<i64: 1, 128>}, {transform_indices = @transform_3, window_bounds = array<i64: 64, 128>}]} {
    %c0 = arith.constant 0 : index
    %c0_0 = arith.constant 0 : index
    %0 = vector.load %arg1[%c0, %c0_0] : memref<64x36xf32, #tpu.memory_space<vmem>>, vector<64x36xf32>
    %c0_1 = arith.constant 0 : index
    %c0_2 = arith.constant 0 : index
    %1 = vector.load %arg2[%c0_1, %c0_2] : memref<36x128xf32, #tpu.memory_space<vmem>>, vector<36x128xf32>
    %cst = arith.constant dense<0.000000e+00> : vector<64x128xf32>
    %2 = tpu.matmul %0, %1, %cst {dimension_numbers = #tpu.dot_dimension_numbers<[1], [0], [0], [1], [0, 0, 1, 1], [], []>} : vector<64x36xf32>, vector<36x128xf32>, vector<64x128xf32> -> vector<64x128xf32>
    %c0_3 = arith.constant 0 : index
    %c0_4 = arith.constant 0 : index
    %3 = vector.load %arg3[%c0_3, %c0_4] : memref<1x128xf32, #tpu.memory_space<vmem>>, vector<1x128xf32>
    %4 = vector.broadcast %3 : vector<1x128xf32> to vector<64x128xf32>
    %5 = arith.addf %2, %4 : vector<64x128xf32>
    %cst_5 = arith.constant 0.000000e+00 : f32
    %6 = vector.broadcast %cst_5 : f32 to vector<64x128xf32>
    %7 = arith.maximumf %5, %6 : vector<64x128xf32>
    %c0_6 = arith.constant 0 : index
    %c0_7 = arith.constant 0 : index
    %8 = vector.load %arg4[%c0_6, %c0_7] : memref<64x128xf32, #tpu.memory_space<vmem>>, vector<64x128xf32>
    tpu.vector_store %arg4[%c0_6, %c0_7], %7 {strides = array<i32>} : memref<64x128xf32, #tpu.memory_space<vmem>>, vector<64x128xf32>,
    return
  }
  func.func @transform_0(%arg0: i32) -> (i32, i32) {
    %c0_i32 = arith.constant 0 : i32
    %c0_i32_0 = arith.constant 0 : i32
    return %arg0, %c0_i32 : i32, i32
  }
  func.func @transform_1(%arg0: i32) -> (i32, i32) {
    %c0_i32 = arith.constant 0 : i32
    %c0_i32_0 = arith.constant 0 : i32
    %c0_i32_1 = arith.constant 0 : i32
    return %c0_i32, %c0_i32_0 : i32, i32
  }
  func.func @transform_2(%arg0: i32) -> (i32, i32) {
    %c0_i32 = arith.constant 0 : i32
    %c0_i32_0 = arith.constant 0 : i32
    %c0_i32_1 = arith.constant 0 : i32
    return %c0_i32, %c0_i32_0 : i32, i32
  }
  func.func @transform_3(%arg0: i32) -> (i32, i32) {
    %c0_i32 = arith.constant 0 : i32
    %c0_i32_0 = arith.constant 0 : i32
    return %arg0, %c0_i32 : i32, i32
  }
}

</mosaic_0001>

<llo_original>
// kernel: tpu_custom_call.1
$region0: #{tpu_custom_call.1}
  #allocation0 [shape = 'u32[]', space=smem, size = 0x4, offset = 0x4, fixed_abs, tag = 'smem constant byte address 0x4 - core index']
  #allocation1 [shape = 'u32[144,128]{1,0:T(1,128)}', space=vmem, size = 0x12000, scoped, tag = 'internal scratch']
  %s0 = inlined_call_operand.vmem [shape: f32[128,36], index: 0, kind: input, shape index: {}]
  %s1 = inlined_call_operand.vmem [shape: f32[36,128], index: 1, kind: input, shape index: {}]
  %s2 = inlined_call_operand.vmem [shape: f32[1,128], index: 2, kind: input, shape index: {}]
  %s3 = inlined_call_operand.hbm [shape: f32[128,128], index: 3, kind: output, shape index: {}]
  %s4 = sld [smem:[#allocation0]]
  $region45: #{tpu_custom_call.1} parent=0
    _
  %s6 = ssub.s32 1, %s4
  %s7 = scalar_select 0, %s6, %s4
  $region1: #{tpu_custom_call.1} parent=0
    #allocation2 [shape = 'u8[65536]{0}', space=vmem, size = 0x10000, scoped, tag = 'output window, operand 0']
    #allocation3 [shape = 's32[2]{0}', space=sflag, size = 0x8, scoped, tag = 'scoped memory for tpu_custom_call.1']
    %8 = vsyncpa [#allocation3], 0
    %s9 = scalar_lea.sflag [#allocation3], 1
    %10 = vsyncpa %s9, 0
    loop: start=0, step=1, limit=4
    $region2: #{tpu_custom_call.1} parent=1 // loop_pre_header
      _
    $region3: #{tpu_custom_call.1} parent=1 // loop_header
      %s12 = sphi 0, %s16
      %p13 = scmp.ge.s32.totalorder %s12, 4
      %s22 = sphi 0, %s24
      %s25 = sphi 0, %s22
      %s26 = sphi 0, %s25
      %s42 = sphi 0, %s26
      %s46 = sphi 0, %s46
      %s48 = sphi 0, %s46
      %s49 = sphi 0, %s48
      %s63 = sphi 0, %s49
      %s67 = sphi 0, %s67
      %s69 = sphi 0, %s67
      %s70 = sphi 0, %s69
      %s84 = sphi 0, %s70
      %s90 = sphi 0, %s92
      %s93 = sphi 0, %s90
      %s94 = sphi 0, %s93
      %s110 = sphi 0, %s94
    $region4: #{tpu_custom_call.1} parent=1 // loop_header_branch
      %15 = sbr.rel (%p13) target = $region8
    $region5: #{tpu_custom_call.1} parent=1 // loop_body
      %s17 = ssub.s32 %s12, 1
      %s18 = ssub.s32 %s12, 2
      %s19 = sadd.s32 %s12, 1
      %s20 = ssub.s32 %s12, %s19
      %p21 = scmp.eq.s32.totalorder %s20, 0
      %s23 = sadd.s32 %s22, 1
      %s24 = scalar_select %p21, %s22, %s23
      %p27 = pneg %p21
      %p28 = scmp.eq.s32.totalorder %s12, 1
      %p29 = por %p27, %p28
      %p30 = scmp.ne.s32.totalorder %s22, %s25
      %p31 = scmp.eq.s32.totalorder %s12, 0
      %p32 = por %p30, %p31
      %p33 = scmp.ne.s32.totalorder %s22, %s25
      %p34 = scmp.eq.s32.totalorder %s17, 1
      %p35 = por %p33, %p34
      %p36 = scmp.ne.s32.totalorder %s25, %s26
      %p37 = scmp.eq.s32.totalorder %s17, 0
      %p38 = por %p36, %p37
      %p39 = scmp.ne.s32.totalorder %s25, %s26
      %p40 = scmp.eq.s32.totalorder %s18, 1
      %p41 = por %p39, %p40
      %p43 = scmp.ne.s32.totalorder %s26, %s42
      %p44 = scmp.eq.s32.totalorder %s18, 0
      %p45 = por %p43, %p44
      %s47 = sadd.s32 %s46, 1
      %p50 = scmp.eq.s32.totalorder %s12, 1
      %p51 = scmp.ne.s32.totalorder %s46, %s48
      %p52 = scmp.eq.s32.totalorder %s12, 0
      %p53 = por %p51, %p52
      %p54 = scmp.ne.s32.totalorder %s46, %s48
      %p55 = scmp.eq.s32.totalorder %s17, 1
      %p56 = por %p54, %p55
      %p57 = scmp.ne.s32.totalorder %s48, %s49
      %p58 = scmp.eq.s32.totalorder %s17, 0
      %p59 = por %p57, %p58
      %p60 = scmp.ne.s32.totalorder %s48, %s49
      %p61 = scmp.eq.s32.totalorder %s18, 1
      %p62 = por %p60, %p61
      %p64 = scmp.ne.s32.totalorder %s49, %s63
      %p65 = scmp.eq.s32.totalorder %s18, 0
      %p66 = por %p64, %p65
      %s68 = sadd.s32 %s67, 1
      %p71 = scmp.eq.s32.totalorder %s12, 1
      %p72 = scmp.ne.s32.totalorder %s67, %s69
      %p73 = scmp.eq.s32.totalorder %s12, 0
      %p74 = por %p72, %p73
      %p75 = scmp.ne.s32.totalorder %s67, %s69
      %p76 = scmp.eq.s32.totalorder %s17, 1
      %p77 = por %p75, %p76
      %p78 = scmp.ne.s32.totalorder %s69, %s70
      %p79 = scmp.eq.s32.totalorder %s17, 0
      %p80 = por %p78, %p79
      %p81 = scmp.ne.s32.totalorder %s69, %s70
      %p82 = scmp.eq.s32.totalorder %s18, 1
      %p83 = por %p81, %p82
      %p85 = scmp.ne.s32.totalorder %s70, %s84
      %p86 = scmp.eq.s32.totalorder %s18, 0
      %p87 = por %p85, %p86
      %s88 = ssub.s32 %s12, %s19
      %p89 = scmp.eq.s32.totalorder %s88, 0
      %s91 = sadd.s32 %s90, 1
      %s92 = scalar_select %p89, %s90, %s91
      %p95 = pneg %p89
      %p96 = scmp.eq.s32.totalorder %s12, 1
      %p97 = por %p95, %p96
      %p98 = scmp.ne.s32.totalorder %s90, %s93
      %p99 = scmp.eq.s32.totalorder %s12, 0
      %p100 = por %p98, %p99
      %p101 = scmp.ne.s32.totalorder %s90, %s93
      %p102 = scmp.eq.s32.totalorder %s17, 1
      %p103 = por %p101, %p102
      %p104 = scmp.ne.s32.totalorder %s93, %s94
      %p105 = scmp.eq.s32.totalorder %s17, 0
      %p106 = por %p104, %p105
      %p107 = scmp.ne.s32.totalorder %s93, %s94
      %p108 = scmp.eq.s32.totalorder %s18, 1
      %p109 = por %p107, %p108
      %p111 = scmp.ne.s32.totalorder %s94, %s110
      %p112 = scmp.eq.s32.totalorder %s18, 0
      %p113 = por %p111, %p112
      %p114 = scmp.le.s32.totalorder 1, %s12
      %p115 = scmp.lt.s32.totalorder %s12, 3
      %p116 = pnand %p114, %p115
      %p117 = pneg %p116
      // Predicated region
      $region9: #{tpu_custom_call.1} parent=5 // pred_check
        _
      $region10: #{tpu_custom_call.1} parent=5 // pred_check_branch
        %119 = sbr.rel (%p116) target = $region12
      $region11: #{tpu_custom_call.1} parent=5 // pred_region
        %s120 = ssub.s32 %s12, 1
        // Predicated region
        $region13: #{tpu_custom_call.1} parent=11 // pred_check
          %p121 = pneg %p59
        $region14: #{tpu_custom_call.1} parent=11 // pred_check_branch
          %123 = sbr.rel (%p121) target = $region16
        $region15: #{tpu_custom_call.1} parent=11 // pred_region
          _
        $region16: #{tpu_custom_call.1} parent=11 // pred_fallthru
          _
        // Predicated region
        $region17: #{tpu_custom_call.1} parent=11 // pred_check
          %p124 = pneg %p80
        $region18: #{tpu_custom_call.1} parent=11 // pred_check_branch
          %126 = sbr.rel (%p124) target = $region20
        $region19: #{tpu_custom_call.1} parent=11 // pred_region
          _
        $region20: #{tpu_custom_call.1} parent=11 // pred_fallthru
          _
      $region12: #{tpu_custom_call.1} parent=5 // pred_fallthru
        _
      %p127 = scmp.lt.s32.totalorder %s12, 2
      // Predicated region
      $region21: #{tpu_custom_call.1} parent=5 // pred_check
        %p128 = pneg %p127
      $region22: #{tpu_custom_call.1} parent=5 // pred_check_branch
        %130 = sbr.rel (%p128) target = $region24
      $region23: #{tpu_custom_call.1} parent=5 // pred_region
        // Predicated region
        $region25: #{tpu_custom_call.1} parent=23 // pred_check
          %p131 = pneg %p32
        $region26: #{tpu_custom_call.1} parent=23 // pred_check_branch
          %133 = sbr.rel (%p131) target = $region28
        $region27: #{tpu_custom_call.1} parent=23 // pred_region
          %s134 = smul.u32 8, %s12
          %p135 = scmp.lt.s32.totalorder %s134, 15
          %s136 = scalar_select %p135, %s134, 15
          %s137 = smul.addr %s136, 8
          %s138 = scalar_lea.vmem %s0, %s137
          %s139 = smul.u32 8, %s12
        $region28: #{tpu_custom_call.1} parent=23 // pred_fallthru
          _
      $region24: #{tpu_custom_call.1} parent=5 // pred_fallthru
        _
      %p140 = scmp.le.s32.totalorder 1, %s12
      %p141 = scmp.lt.s32.totalorder %s12, 3
      %p142 = pnand %p140, %p141
      %p143 = pneg %p142
      // Predicated region
      $region29: #{tpu_custom_call.1} parent=5 // pred_check
        _
      $region30: #{tpu_custom_call.1} parent=5 // pred_check_branch
        %145 = sbr.rel (%p142) target = $region32
      $region31: #{tpu_custom_call.1} parent=5 // pred_region
        %s146 = ssub.s32 %s12, 1
        %s147 = smul.u32 8, %s17
        %p148 = scmp.lt.s32.totalorder %s147, 15
        %s149 = scalar_select %p148, %s147, 15
        %s150 = smul.addr %s149, 8
        %s151 = scalar_lea.vmem %s0, %s150
        %p152 = pneg %p38
        %p153 = pneg %p35
        %p154 = pneg %p59
        %p155 = pneg %p56
        %p156 = pneg %p80
        %p157 = pneg %p77
        %p158 = pneg %p106
        %p159 = pneg %p103
        %s160 = sand.u32 %s93, 1
        %s161 = scalar_lea.sflag [#allocation3], %s160
        %s162 = sand.u32 %s93, 1
        %s163 = smul.addr %s162, 64
        %s164 = scalar_lea.vmem [#allocation2], %s163
        %s165 = smul.u32 8, %s17
        %p166 = scmp.lt.s32.totalorder %s165, 15
        %s167 = scalar_select %p166, %s165, 15
        %s168 = smul.addr %s167, 8
        %s169 = scalar_lea.vmem %s0, %s168
        %s170 = smul.u32 8, %s17
        %s171 = smul.u32 8, %s17
        %v172 = vld [vmem:[%s169] sm:$0xff]
        %v173 = vld [vmem:[%s169 + $0x8] sm:$0xff]
        %v174 = vld [vmem:[%s169 + $0x10] sm:$0xff]
        %v175 = vld [vmem:[%s169 + $0x18] sm:$0xff]
        %v176 = vld [vmem:[%s169 + $0x20] sm:$0xff]
        %v177 = vld [vmem:[%s169 + $0x28] sm:$0xff]
        %v178 = vld [vmem:[%s169 + $0x30] sm:$0xff]
        %v179 = vld [vmem:[%s169 + $0x38] sm:$0xff]
        %v180 = vld [vmem:[%s1] sm:$0xff]
        %v181 = vld [vmem:[%s1 + $0x8] sm:$0xff]
        %v182 = vld [vmem:[%s1 + $0x10] sm:$0xff]
        %v183 = vld [vmem:[%s1 + $0x18] sm:$0xff]
        %v184 = vld [vmem:[%s1 + $0x20] sm:$0xf]
        %v185 = vld [vmem:[%s2] sm:$0x1]
        %v187 = vlaneseq
        %v188 = vshrl.u32 %v187, 7
        %v189 = vsub.s32 0, %v188
        %v190 = vrot.slane %v185, %v189
        %vm192 = vcmask 293888
        %v194 = vsel %vm192, %v172, 0
        %v197 = vsel %vm192, %v173, 0
        %v200 = vsel %vm192, %v174, 0
        %v203 = vsel %vm192, %v175, 0
        %v206 = vsel %vm192, %v176, 0
        %v209 = vsel %vm192, %v177, 0
        %v212 = vsel %vm192, %v178, 0
        %v215 = vsel %vm192, %v179, 0
        %vm217 = vcmask 1043456
        %v219 = vsel %vm217, %v184, 0
        %221 = vmatprep.subr.mxu0 0.0
        %222 = vmatpush1.msra.mxu0 %v180
        %223 = vmatprep.subr.mxu0 0.0
        %224 = vmatpush1.msra.mxu0 %v181
        %225 = vmatprep.subr.mxu0 0.0
        %226 = vmatpush1.msra.mxu0 %v182
        %227 = vmatprep.subr.mxu0 0.0
        %228 = vmatpush1.msra.mxu0 %v183
        %229 = vmatprep.subr.mxu0 0.0
        %230 = vmatpush1.msra.mxu0 %v219
        %231 = vmatprep.subr.mxu0 0.0
        %232 = vmatpush1.msra.mxu0 0.0
        %233 = vmatprep.subr.mxu0 0.0
        %234 = vmatpush1.msra.mxu0 0.0
        %235 = vmatprep.subr.mxu0 0.0
        %236 = vmatpush1.msra.mxu0 0.0
        %237 = vmatprep.subr.mxu0 0.0
        %238 = vmatpush1.msra.mxu0 0.0
        %239 = vmatprep.subr.mxu0 0.0
        %240 = vmatpush1.msra.mxu0 0.0
        %241 = vmatprep.subr.mxu0 0.0
        %242 = vmatpush1.msra.mxu0 0.0
        %243 = vmatprep.subr.mxu0 0.0
        %244 = vmatpush1.msra.mxu0 0.0
        %245 = vmatprep.subr.mxu0 0.0
        %246 = vmatpush1.msra.mxu0 0.0
        %247 = vmatprep.subr.mxu0 0.0
        %248 = vmatpush1.msra.mxu0 0.0
        %249 = vmatprep.subr.mxu0 0.0
        %250 = vmatpush1.msra.mxu0 0.0
        %251 = vmatprep.subr.mxu0 0.0
        %252 = vmatpush1.msra.mxu0 0.0
        %253 = vmatprep.subr.mxu0 0.0
        %254 = vmatpush1.msra.mxu0 0.0
        %255 = vmatprep.subr.mxu0 0.0
        %256 = vmatpush1.msra.mxu0 0.0
        %257 = vmatprep.subr.mxu0 0.0
        %258 = vmatpush1.msra.mxu0 0.0
        %259 = vmatprep.subr.mxu0 0.0
        %260 = vmatpush1.msra.mxu0 0.0
        %261 = vmatprep.subr.mxu0 0.0
        %262 = vmatpush1.msra.mxu0 0.0
        %263 = vmatprep.subr.mxu0 0.0
        %264 = vmatpush1.msra.mxu0 0.0
        %265 = vmatprep.subr.mxu0 0.0
        %266 = vmatpush1.msra.mxu0 0.0
        %267 = vmatprep.subr.mxu0 0.0
        %268 = vmatpush1.msra.mxu0 0.0
        %269 = vmatprep.subr.mxu0 0.0
        %270 = vmatpush1.msra.mxu0 0.0
        %271 = vmatprep.subr.mxu0 0.0
        %272 = vmatpush1.msra.mxu0 0.0
        %273 = vmatprep.subr.mxu0 0.0
        %274 = vmatpush1.msra.mxu0 0.0
        %275 = vmatprep.subr.mxu0 0.0
        %276 = vmatpush1.msra.mxu0 0.0
        %277 = vmatprep.subr.mxu0 0.0
        %278 = vmatpush1.msra.mxu0 0.0
        %279 = vmatprep.subr.mxu0 0.0
        %280 = vmatpush1.msra.mxu0 0.0
        %281 = vmatprep.subr.mxu0 0.0
        %282 = vmatpush1.msra.mxu0 0.0
        %283 = vmatprep.subr.mxu0 0.0
        %284 = vmatpush1.msra.mxu0 0.0
        %285 = vmatprep.mubr.f32.mxu0 0.0
        %286 = vmatmul.mubr.f32.gmra.mrb[0].mxu0 %v194
        %v287 = vpop.f32.mrb[0].mxu0
        %v288 = vadd.f32 %v190, %v287
        %v289 = vpop.f32.mrb[0].mxu0
        %290 = vmatprep.mubr.f32.mxu0 0.0
        %291 = vmatmul.mubr.f32.gmra.mrb[0].mxu0 %v197
        %v292 = vpop.f32.mrb[0].mxu0
        %v293 = vadd.f32 %v190, %v292
        %v294 = vpop.f32.mrb[0].mxu0
        %295 = vmatprep.mubr.f32.mxu0 0.0
        %296 = vmatmul.mubr.f32.gmra.mrb[0].mxu0 %v200
        %v297 = vpop.f32.mrb[0].mxu0
        %v298 = vadd.f32 %v190, %v297
        %v299 = vpop.f32.mrb[0].mxu0
        %300 = vmatprep.mubr.f32.mxu0 0.0
        %301 = vmatmul.mubr.f32.gmra.mrb[0].mxu0 %v203
        %v302 = vpop.f32.mrb[0].mxu0
        %v303 = vadd.f32 %v190, %v302
        %v304 = vpop.f32.mrb[0].mxu0
        %305 = vmatprep.mubr.f32.mxu0 0.0
        %306 = vmatmul.mubr.f32.gmra.mrb[0].mxu0 %v206
        %v307 = vpop.f32.mrb[0].mxu0
        %v308 = vadd.f32 %v190, %v307
        %v309 = vpop.f32.mrb[0].mxu0
        %310 = vmatprep.mubr.f32.mxu0 0.0
        %311 = vmatmul.mubr.f32.gmra.mrb[0].mxu0 %v209
        %v312 = vpop.f32.mrb[0].mxu0
        %v313 = vadd.f32 %v190, %v312
        %v314 = vpop.f32.mrb[0].mxu0
        %315 = vmatprep.mubr.f32.mxu0 0.0
        %316 = vmatmul.mubr.f32.gmra.mrb[0].mxu0 %v212
        %v317 = vpop.f32.mrb[0].mxu0
        %v318 = vadd.f32 %v190, %v317
        %v319 = vpop.f32.mrb[0].mxu0
        %320 = vmatprep.mubr.f32.mxu0 0.0
        %321 = vmatmul.mubr.f32.gmra.mrb[0].mxu0 %v215
        %v322 = vpop.f32.mrb[0].mxu0
        %v323 = vadd.f32 %v190, %v322
        %v324 = vpop.f32.mrb[0].mxu0
        %325 = vdwg.mxu0
        %v326 = vmax.f32 %v288, 0.0
        %v327 = vmax.f32 %v293, 0.0
        %v328 = vmax.f32 %v298, 0.0
        %v329 = vmax.f32 %v303, 0.0
        %v330 = vmax.f32 %v308, 0.0
        %v331 = vmax.f32 %v313, 0.0
        %v332 = vmax.f32 %v318, 0.0
        %v333 = vmax.f32 %v323, 0.0
        %334 = vst [vmem:[%s164] sm:$0xff] %v326
        %335 = vst [vmem:[%s164 + $0x8] sm:$0xff] %v327
        %336 = vst [vmem:[%s164 + $0x10] sm:$0xff] %v328
        %337 = vst [vmem:[%s164 + $0x18] sm:$0xff] %v329
        %338 = vst [vmem:[%s164 + $0x20] sm:$0xff] %v330
        %339 = vst [vmem:[%s164 + $0x28] sm:$0xff] %v331
        %340 = vst [vmem:[%s164 + $0x30] sm:$0xff] %v332
        %341 = vst [vmem:[%s164 + $0x38] sm:$0xff] %v333
        %s342 = sand.u32 %s93, 1
        %s343 = scalar_lea.sflag [#allocation3], %s342
        %s344 = sand.u32 %s93, 1
        %s345 = smul.addr %s344, 64
        %s346 = scalar_lea.vmem [#allocation2], %s345
        // Predicated region
        $region33: #{tpu_custom_call.1} parent=31 // pred_check
          %p347 = pneg %p103
        $region34: #{tpu_custom_call.1} parent=31 // pred_check_branch
          %349 = sbr.rel (%p347) target = $region36
        $region35: #{tpu_custom_call.1} parent=31 // pred_region
          %s350 = smul.u32 8, %s17
          %s352 = ssub.s32 1024, 1024
          %353 = vsyncadd %s343, %s352
          %s354 = smul.addr %s350, 128
          %s355 = scalar_lea.hbm %s3, %s354
          %s356 = sshll.u32 %s346, 4
          %s357 = int_to_ptr.vmem [resolvable:$true] %s356
          %362 = dma.vmem_to_hbm [thread:$0]  %s357, 1024, %s355, %s343, 128, 128, 8
        $region36: #{tpu_custom_call.1} parent=31 // pred_fallthru
          _
      $region32: #{tpu_custom_call.1} parent=5 // pred_fallthru
        _
      %p363 = scmp.le.s32.totalorder 2, %s12
      // Predicated region
      $region37: #{tpu_custom_call.1} parent=5 // pred_check
        %p364 = pneg %p363
      $region38: #{tpu_custom_call.1} parent=5 // pred_check_branch
        %366 = sbr.rel (%p364) target = $region40
      $region39: #{tpu_custom_call.1} parent=5 // pred_region
        %s367 = ssub.s32 %s12, 2
        // Predicated region
        $region41: #{tpu_custom_call.1} parent=39 // pred_check
          %p368 = pneg %p109
        $region42: #{tpu_custom_call.1} parent=39 // pred_check_branch
          %370 = sbr.rel (%p368) target = $region44
        $region43: #{tpu_custom_call.1} parent=39 // pred_region
          %s371 = sand.u32 %s94, 1
          %s372 = scalar_lea.sflag [#allocation3], %s371
          %s373 = sand.u32 %s94, 1
          %s374 = smul.addr %s373, 64
          %s375 = scalar_lea.vmem [#allocation2], %s374
          %376 = dma.done %s372, 1024
        $region44: #{tpu_custom_call.1} parent=39 // pred_fallthru
          _
      $region40: #{tpu_custom_call.1} parent=5 // pred_fallthru
        _
    $region6: #{tpu_custom_call.1} parent=1 // loop_footer
      %s16 = sadd.s32 1, %s12
    $region7: #{tpu_custom_call.1} parent=1 // loop_footer_branch
      %11 = sbr.rel target = $region3
    $region8: #{tpu_custom_call.1} parent=1 // loop_exit
      _
    %377 = vsyncpa [#allocation3], 1
    %s378 = scalar_lea.sflag [#allocation3], 1
    %379 = vsyncpa %s378, 1

</llo_original>
